<compile_context>
chip_gen: v7x
topology: tpu7x:2x2x1
jax: 0.10.0
libtpu: 0.0.40
codegen_flags: <defaults>
</compile_context>

<pallas_src>
import functools

import jax
import jax.numpy as jnp
from jax import lax
from jax.experimental import pallas as pl
from jax.experimental.pallas import tpu as pltpu


def _vmem_capacity_bytes():
    try:
        return int(pltpu.get_tpu_info().vmem_capacity_bytes)
    except Exception:
        return 64 << 20  # conservative (v7x per-TensorCore VMEM)


# --------------------------------------------------------------------------
# Resident path: whole (nb, HW, C) block in VMEM, one read + one write of x.
# --------------------------------------------------------------------------
def _grn_resident_kernel(x_ref, gamma_ref, beta_ref, o_ref, *, chunk):
    nb, hw, c = x_ref.shape
    n_full = hw // chunk
    rem = hw - n_full * chunk

    g = gamma_ref[...].astype(jnp.float32)[:, None, :]   # (1, 1, C)
    b = beta_ref[...].astype(jnp.float32)[:, None, :]    # (1, 1, C)

    # ---- Phase 1: Gx^2 = sum_HW x^2, chunked so f32 temporaries stay small.
    def _sumsq(start, size):
        xc = x_ref[:, pl.ds(start, size), :].astype(jnp.float32)
        return jnp.sum(xc * xc, axis=1, keepdims=True)    # (nb, 1, C)

    acc = jnp.zeros((nb, 1, c), jnp.float32)
    if n_full > 0:
        def body(i, a):
            start = pl.multiple_of(i * chunk, chunk)
            return a + _sumsq(start, chunk)
        acc = lax.fori_loop(0, n_full, body, acc)
    if rem > 0:
        acc = acc + _sumsq(n_full * chunk, rem)

    gx = jnp.sqrt(acc)                                    # (nb, 1, C)
    denom = jnp.mean(gx, axis=-1, keepdims=True) + 1e-6   # (nb, 1, 1)
    nx = gx / denom
    scale = g * nx + 1.0                                  # (nb, 1, C)

    # Hoist broadcasts out of the phase-2 loop (JAX does not CSE them).
    scale_c = jnp.broadcast_to(scale, (nb, chunk, c))
    b_c = jnp.broadcast_to(b, (nb, chunk, c))

    # ---- Phase 2: y = x * scale + beta, re-reading the VMEM-resident block.
    if n_full > 0:
        def out_body(i, carry):
            start = pl.multiple_of(i * chunk, chunk)
            xc = x_ref[:, pl.ds(start, chunk), :].astype(jnp.float32)
            o_ref[:, pl.ds(start, chunk), :] = (xc * scale_c + b_c).astype(o_ref.dtype)
            return carry
        lax.fori_loop(0, n_full, out_body, 0)
    if rem > 0:
        start = n_full * chunk
        xc = x_ref[:, pl.ds(start, rem), :].astype(jnp.float32)
        o_ref[:, pl.ds(start, rem), :] = (xc * scale + b).astype(o_ref.dtype)


# --------------------------------------------------------------------------
# Tiled fallback: pass 1 (sum of squares over HW tiles) + pass 2 (apply).
# --------------------------------------------------------------------------
def _grn_sumsq_kernel(x_ref, ss_ref, *, hw_true, hw_tile):
    t = pl.program_id(1)

    @pl.when(t == 0)
    def _():
        ss_ref[...] = jnp.zeros_like(ss_ref)

    xc = x_ref[...].astype(jnp.float32)                   # (1, hw_tile, C)
    if hw_true % hw_tile != 0:
        # Boundary tile: rows past HW hold stale VMEM data -> mask to zero.
        rows = t * hw_tile + lax.broadcasted_iota(jnp.int32, xc.shape, 1)
        xc = jnp.where(rows < hw_true, xc, 0.0)
    ss_ref[...] += jnp.sum(xc * xc, axis=1, keepdims=True)


def _grn_apply_kernel(x_ref, scale_ref, beta_ref, o_ref):
    xc = x_ref[...].astype(jnp.float32)                   # (1, hw_tile, C)
    o_ref[...] = (xc * scale_ref[...] + beta_ref[...]).astype(o_ref.dtype)


# --------------------------------------------------------------------------
# Wrapper
# --------------------------------------------------------------------------
def grn_pallas(x_nhwc, gamma, beta, *, force_path=None, tile_rows=None):
    """x_nhwc: (N, H, W, C); gamma/beta: (1, 1, 1, C) as in the torch module."""
    N, H, W, C = x_nhwc.shape
    HW = H * W
    itemsize = jnp.dtype(x_nhwc.dtype).itemsize

    x_flat = x_nhwc.reshape(N, HW, C)
    gamma2 = gamma.reshape(1, C)
    beta2 = beta.reshape(1, C)

    vmem_cap = _vmem_capacity_bytes()
    single_tc = vmem_cap >= (100 << 20)       # v5e/v6e: 128 MiB VMEM, 1 TC
    target_block_bytes = (20 << 20) if single_tc else (12 << 20)
    reserve = 8 << 20

    block_bytes_1 = HW * C * itemsize

    # Batch elements per grid step: largest divisor of N that fits the target;
    # on 2-TC chips prefer keeping >=2 grid steps so both cores get work.
    nb = 1
    for cand in range(1, N + 1):
        if N % cand:
            continue
        if cand * block_bytes_1 > target_block_bytes:
            break
        if single_tc or N // cand >= 2 or N == 1:
            nb = cand
    block_bytes = nb * block_bytes_1

    # In-kernel chunk rows: bound the f32 slab to ~512 KiB, multiple of 8.
    rows = (512 << 10) // max(1, nb * C * 4)
    rows = max(8, min(rows, 512))
    rows = (rows // 8) * 8
    chunk = min(HW, rows)

    slab_bytes = 6 * nb * chunk * C * 4                  # f32 temps + hoisted bcasts
    resident_need = 4 * block_bytes + slab_bytes + (2 << 20)

    use_resident = resident_need <= vmem_cap - reserve
    if force_path == "resident":
        use_resident = True
    elif force_path == "tiled":
        use_resident = False

    if use_resident:
        grid_n = N // nb
        vmem_limit = int(min(max(resident_need, 32 << 20), vmem_cap - (4 << 20)))
        kernel = functools.partial(_grn_resident_kernel, chunk=chunk)
        out_flat = pl.pallas_call(
            kernel,
            out_shape=jax.ShapeDtypeStruct((N, HW, C), x_nhwc.dtype),
            grid_spec=pltpu.PrefetchScalarGridSpec(
                num_scalar_prefetch=0,
                grid=(grid_n,),
                in_specs=[
                    pl.BlockSpec((nb, HW, C), lambda n: (n, 0, 0)),
                    pl.BlockSpec((1, C), lambda n: (0, 0)),
                    pl.BlockSpec((1, C), lambda n: (0, 0)),
                ],
                out_specs=pl.BlockSpec((nb, HW, C), lambda n: (n, 0, 0)),
            ),
            compiler_params=pltpu.CompilerParams(
                dimension_semantics=("parallel",),
                vmem_limit_bytes=vmem_limit,
            ),
        )(x_flat, gamma2, beta2)
        return out_flat.reshape(N, H, W, C)

    # ---------------- tiled two-pass fallback ----------------
    if tile_rows is not None:
        hw_tile = int(tile_rows)
    else:
        rows_t = (2 << 20) // max(1, C * itemsize)
        rows_t = max(8, min(rows_t, HW))
        hw_tile = None
        for d in range(rows_t, 0, -1):       # prefer an exact divisor of HW
            if HW % d == 0 and (d % 8 == 0 or d == HW):
                hw_tile = d
                break
        if hw_tile is None:
            hw_tile = (rows_t // 8) * 8 if HW >= 8 else HW
    hw_tile = max(1, min(hw_tile, HW))
    n_tiles = -(-HW // hw_tile)

    tile_x = hw_tile * C * itemsize
    tile_f32 = hw_tile * C * 4
    vmem_tiled = int(min(max(4 * tile_x + 4 * tile_f32 + (2 << 20), 32 << 20),
                         vmem_cap - (4 << 20)))

    sumsq = pl.pallas_call(
        functools.partial(_grn_sumsq_kernel, hw_true=HW, hw_tile=hw_tile),
        out_shape=jax.ShapeDtypeStruct((N, 1, C), jnp.float32),
        grid_spec=pltpu.PrefetchScalarGridSpec(
            num_scalar_prefetch=0,
            grid=(N, n_tiles),
            in_specs=[pl.BlockSpec((1, hw_tile, C), lambda n, t: (n, t, 0))],
            out_specs=pl.BlockSpec((1, 1, C), lambda n, t: (n, 0, 0)),
        ),
        compiler_params=pltpu.CompilerParams(
            dimension_semantics=("parallel", "arbitrary"),
            vmem_limit_bytes=vmem_tiled,
        ),
    )(x_flat)

    # Tiny (N, C) glue in plain JAX: sqrt, channel mean, fused scale.
    gx = jnp.sqrt(sumsq)                                             # (N, 1, C)
    nx = gx / (jnp.mean(gx, axis=-1, keepdims=True) + 1e-6)
    scale = gamma.reshape(1, 1, C).astype(jnp.float32) * nx + 1.0    # (N, 1, C)
    beta3 = beta.reshape(1, 1, C).astype(jnp.float32)

    out_flat = pl.pallas_call(
        _grn_apply_kernel,
        out_shape=jax.ShapeDtypeStruct((N, HW, C), x_nhwc.dtype),
        grid_spec=pltpu.PrefetchScalarGridSpec(
            num_scalar_prefetch=0,
            grid=(N, n_tiles),
            in_specs=[
                pl.BlockSpec((1, hw_tile, C), lambda n, t: (n, t, 0)),
                pl.BlockSpec((1, 1, C), lambda n, t: (n, 0, 0)),
                pl.BlockSpec((1, 1, C), lambda n, t: (0, 0, 0)),
            ],
            out_specs=pl.BlockSpec((1, hw_tile, C), lambda n, t: (n, t, 0)),
        ),
        compiler_params=pltpu.CompilerParams(
            dimension_semantics=("parallel", "parallel"),
            vmem_limit_bytes=vmem_tiled,
        ),
    )(x_flat, scale, beta3)

    return out_flat.reshape(N, H, W, C)


def grn_ref(x_nhwc, gamma, beta):
    """Pure-JAX reference matching the PyTorch forward exactly."""
    xf = x_nhwc.astype(jnp.float32)
    gx = jnp.sqrt(jnp.sum(xf * xf, axis=(1, 2), keepdims=True))      # (N,1,1,C)
    nx = gx / (jnp.mean(gx, axis=-1, keepdims=True) + 1e-6)
    return (gamma.astype(jnp.float32) * (xf * nx)
            + beta.astype(jnp.float32) + xf).astype(x_nhwc.dtype)


if __name__ == "__main__":
    root = jax.random.PRNGKey(0)

    # (N, H, W, C, force_path, tile_rows)
    configs = [
        (2, 8, 8, 32, None, None),       # C<128 (masked stores), resident
        (4, 7, 7, 128, None, None),      # small HW, nb>1 batch blocking
        (2, 24, 24, 384, None, None),    # chunked HW loop + remainder
        (2, 12, 11, 64, "tiled", 40),    # tiled fallback, boundary tile masking
        (2, 16, 16, 64, "tiled", 64),    # tiled fallback, exact tiling
    ]

    for i, (N, H, W, C, force_path, tile_rows) in enumerate(configs):
        kx, kg, kb = jax.random.split(jax.random.fold_in(root, i), 3)
        x = jax.random.normal(kx, (N, H, W, C), dtype=jnp.float32)
        # Module inits gamma/beta to zeros; use small random values so the
        # normalization path is actually exercised.
        gamma = 0.1 * jax.random.normal(kg, (1, 1, 1, C), dtype=jnp.float32)
        beta = 0.1 * jax.random.normal(kb, (1, 1, 1, C), dtype=jnp.float32)

        out = grn_pallas(x, gamma, beta, force_path=force_path, tile_rows=tile_rows)
        jax.block_until_ready(out)

        ref = grn_ref(x, gamma, beta)
        assert out.shape == (N, H, W, C)
        assert jnp.allclose(out, ref, atol=2e-5, rtol=2e-5), f"mismatch at config {i}"

    print("KERNEL_OK")
</pallas_src>

<mosaic_0001>
module attributes {stable_mosaic.version = 11 : i64} {
  func.func @_grn_resident_kernel(%arg0: i32, %arg1: memref<1x64x32xf32, #tpu.memory_space<vmem>>, %arg2: memref<1x32xf32, #tpu.memory_space<vmem>>, %arg3: memref<1x32xf32, #tpu.memory_space<vmem>>, %arg4: memref<1x64x32xf32, #tpu.memory_space<vmem>>) attributes {dimension_semantics = [#tpu.dimension_semantics<parallel>], iteration_bounds = array<i64: 2>, scalar_prefetch = 0 : i64, scratch_operands = 0 : i64, tpu.core_type = #tpu.core_type<tc>, window_params = [{transform_indices = @transform_0, window_bounds = array<i64: 1, 64, 32>}, {pipeline_mode = #tpu.pipeline_mode<synchronous>, transform_indices = @transform_1, window_bounds = array<i64: 1, 32>}, {pipeline_mode = #tpu.pipeline_mode<synchronous>, transform_indices = @transform_2, window_bounds = array<i64: 1, 32>}, {transform_indices = @transform_3, window_bounds = array<i64: 1, 64, 32>}]} {
    %c0 = arith.constant 0 : index
    %c0_0 = arith.constant 0 : index
    %0 = vector.load %arg2[%c0, %c0_0] : memref<1x32xf32, #tpu.memory_space<vmem>>, vector<1x32xf32>
    %1 = vector.shape_cast %0 : vector<1x32xf32> to vector<1x1x32xf32>
    %c0_1 = arith.constant 0 : index
    %c0_2 = arith.constant 0 : index
    %2 = vector.load %arg3[%c0_1, %c0_2] : memref<1x32xf32, #tpu.memory_space<vmem>>, vector<1x32xf32>
    %3 = vector.shape_cast %2 : vector<1x32xf32> to vector<1x1x32xf32>
    %cst = arith.constant 0.000000e+00 : f32
    %4 = vector.broadcast %cst : f32 to vector<1x1x32xf32>
    %c0_i32 = arith.constant 0 : i32
    %c64_i32 = arith.constant 64 : i32
    %5 = arith.muli %c0_i32, %c64_i32 : i32
    %6 = tpu.assume_multiple %5, 64 : i32
    %c0_3 = arith.constant 0 : index
    %7 = arith.index_cast %6 : i32 to index
    %c0_4 = arith.constant 0 : index
    %8 = vector.load %arg1[%c0_3, %7, %c0_4] : memref<1x64x32xf32, #tpu.memory_space<vmem>>, vector<1x64x32xf32>
    %9 = arith.mulf %8, %8 : vector<1x64x32xf32>
    %cst_5 = arith.constant dense<0.000000e+00> : vector<1x32xf32>
    %10 = vector.multi_reduction <add>, %9, %cst_5 [1] : vector<1x64x32xf32> to vector<1x32xf32>
    %11 = vector.shape_cast %10 : vector<1x32xf32> to vector<1x1x32xf32>
    %12 = arith.addf %4, %11 : vector<1x1x32xf32>
    %c1_i32 = arith.constant 1 : i32
    %13 = math.sqrt %12 : vector<1x1x32xf32>
    %cst_6 = arith.constant dense<0.000000e+00> : vector<1x1xf32>
    %14 = vector.multi_reduction <add>, %13, %cst_6 [2] : vector<1x1x32xf32> to vector<1x1xf32>
    %15 = vector.shape_cast %14 : vector<1x1xf32> to vector<1x1x1xf32>
    %cst_7 = arith.constant 3.200000e+01 : f32
    %16 = vector.broadcast %cst_7 : f32 to vector<1x1x1xf32>
    %17 = arith.divf %15, %16 : vector<1x1x1xf32>
    %cst_8 = arith.constant 9.99999997E-7 : f32
    %18 = vector.broadcast %cst_8 : f32 to vector<1x1x1xf32>
    %19 = arith.addf %17, %18 : vector<1x1x1xf32>
    %20 = vector.broadcast %19 : vector<1x1x1xf32> to vector<1x1x32xf32>
    %21 = arith.divf %13, %20 : vector<1x1x32xf32>
    %22 = arith.mulf %1, %21 : vector<1x1x32xf32>
    %cst_9 = arith.constant 1.000000e+00 : f32
    %23 = vector.broadcast %cst_9 : f32 to vector<1x1x32xf32>
    %24 = arith.addf %22, %23 : vector<1x1x32xf32>
    %25 = vector.shape_cast %24 : vector<1x1x32xf32> to vector<1x1x32xf32>
    %26 = vector.broadcast %25 : vector<1x1x32xf32> to vector<1x64x32xf32>
    %27 = vector.shape_cast %3 : vector<1x1x32xf32> to vector<1x1x32xf32>
    %28 = vector.broadcast %27 : vector<1x1x32xf32> to vector<1x64x32xf32>
    %c0_i32_10 = arith.constant 0 : i32
    %c64_i32_11 = arith.constant 64 : i32
    %29 = arith.muli %c0_i32_10, %c64_i32_11 : i32
    %30 = tpu.assume_multiple %29, 64 : i32
    %c0_12 = arith.constant 0 : index
    %31 = arith.index_cast %30 : i32 to index
    %c0_13 = arith.constant 0 : index
    %32 = vector.load %arg1[%c0_12, %31, %c0_13] : memref<1x64x32xf32, #tpu.memory_space<vmem>>, vector<1x64x32xf32>
    %33 = arith.mulf %32, %26 : vector<1x64x32xf32>
    %34 = arith.addf %33, %28 : vector<1x64x32xf32>
    %c0_14 = arith.constant 0 : index
    %35 = arith.index_cast %30 : i32 to index
    %c0_15 = arith.constant 0 : index
    %36 = vector.load %arg4[%c0_14, %35, %c0_15] : memref<1x64x32xf32, #tpu.memory_space<vmem>>, vector<1x64x32xf32>
    tpu.vector_store %arg4[%c0_14, %35, %c0_15], %34 {strides = array<i32>} : memref<1x64x32xf32, #tpu.memory_space<vmem>>, vector<1x64x32xf32>,
    %c1_i32_16 = arith.constant 1 : i32
    return
  }
  func.func @transform_0(%arg0: i32) -> (i32, i32, i32) {
    %c0_i32 = arith.constant 0 : i32
    %c0_i32_0 = arith.constant 0 : i32
    %c0_i32_1 = arith.constant 0 : i32
    return %arg0, %c0_i32, %c0_i32_0 : i32, i32, i32
  }
  func.func @transform_1(%arg0: i32) -> (i32, i32) {
    %c0_i32 = arith.constant 0 : i32
    %c0_i32_0 = arith.constant 0 : i32
    %c0_i32_1 = arith.constant 0 : i32
    return %c0_i32, %c0_i32_0 : i32, i32
  }
  func.func @transform_2(%arg0: i32) -> (i32, i32) {
    %c0_i32 = arith.constant 0 : i32
    %c0_i32_0 = arith.constant 0 : i32
    %c0_i32_1 = arith.constant 0 : i32
    return %c0_i32, %c0_i32_0 : i32, i32
  }
  func.func @transform_3(%arg0: i32) -> (i32, i32, i32) {
    %c0_i32 = arith.constant 0 : i32
    %c0_i32_0 = arith.constant 0 : i32
    %c0_i32_1 = arith.constant 0 : i32
    return %arg0, %c0_i32, %c0_i32_0 : i32, i32, i32
  }
}

</mosaic_0001>

<llo_original>
// kernel: tpu_custom_call.1
$region0: #{tpu_custom_call.1}
  #allocation0 [shape = 'u32[]', space=smem, size = 0x4, offset = 0x4, fixed_abs, tag = 'smem constant byte address 0x4 - core index']
  #allocation1 [shape = 'u32[144,128]{1,0:T(1,128)}', space=vmem, size = 0x12000, scoped, tag = 'internal scratch']
  %s0 = inlined_call_operand.vmem [shape: f32[2,64,32], index: 0, kind: input, shape index: {}]
  %s1 = inlined_call_operand.vmem [shape: f32[1,32], index: 1, kind: input, shape index: {}]
  %s2 = inlined_call_operand.vmem [shape: f32[1,32], index: 2, kind: input, shape index: {}]
  %s3 = inlined_call_operand.vmem [shape: f32[2,64,32], index: 3, kind: output, shape index: {}]
  %s4 = sld [smem:[#allocation0]]
  $region45: #{tpu_custom_call.1} parent=0
    _
  %s6 = ssub.s32 1, %s4
  %s7 = scalar_select 0, %s6, %s4
  loop: start=0, step=1, limit=4
  $region2: #{tpu_custom_call.1} parent=0 // loop_pre_header
    _
  $region3: #{tpu_custom_call.1} parent=0 // loop_header
    %s9 = sphi 0, %s13
    %p10 = scmp.ge.s32.totalorder %s9, 4
    %s19 = sphi 0, %s21
    %s22 = sphi 0, %s19
    %s23 = sphi 0, %s22
    %s39 = sphi 0, %s23
    %s43 = sphi 0, %s43
    %s45 = sphi 0, %s43
    %s46 = sphi 0, %s45
    %s60 = sphi 0, %s46
    %s64 = sphi 0, %s64
    %s66 = sphi 0, %s64
    %s67 = sphi 0, %s66
    %s81 = sphi 0, %s67
    %s87 = sphi 0, %s89
    %s90 = sphi 0, %s87
    %s91 = sphi 0, %s90
    %s107 = sphi 0, %s91
  $region4: #{tpu_custom_call.1} parent=0 // loop_header_branch
    %12 = sbr.rel (%p10) target = $region8
  $region5: #{tpu_custom_call.1} parent=0 // loop_body
    %s14 = ssub.s32 %s9, 1
    %s15 = ssub.s32 %s9, 2
    %s16 = sadd.s32 %s9, 1
    %s17 = ssub.s32 %s9, %s16
    %p18 = scmp.eq.s32.totalorder %s17, 0
    %s20 = sadd.s32 %s19, 1
    %s21 = scalar_select %p18, %s19, %s20
    %p24 = pneg %p18
    %p25 = scmp.eq.s32.totalorder %s9, 1
    %p26 = por %p24, %p25
    %p27 = scmp.ne.s32.totalorder %s19, %s22
    %p28 = scmp.eq.s32.totalorder %s9, 0
    %p29 = por %p27, %p28
    %p30 = scmp.ne.s32.totalorder %s19, %s22
    %p31 = scmp.eq.s32.totalorder %s14, 1
    %p32 = por %p30, %p31
    %p33 = scmp.ne.s32.totalorder %s22, %s23
    %p34 = scmp.eq.s32.totalorder %s14, 0
    %p35 = por %p33, %p34
    %p36 = scmp.ne.s32.totalorder %s22, %s23
    %p37 = scmp.eq.s32.totalorder %s15, 1
    %p38 = por %p36, %p37
    %p40 = scmp.ne.s32.totalorder %s23, %s39
    %p41 = scmp.eq.s32.totalorder %s15, 0
    %p42 = por %p40, %p41
    %s44 = sadd.s32 %s43, 1
    %p47 = scmp.eq.s32.totalorder %s9, 1
    %p48 = scmp.ne.s32.totalorder %s43, %s45
    %p49 = scmp.eq.s32.totalorder %s9, 0
    %p50 = por %p48, %p49
    %p51 = scmp.ne.s32.totalorder %s43, %s45
    %p52 = scmp.eq.s32.totalorder %s14, 1
    %p53 = por %p51, %p52
    %p54 = scmp.ne.s32.totalorder %s45, %s46
    %p55 = scmp.eq.s32.totalorder %s14, 0
    %p56 = por %p54, %p55
    %p57 = scmp.ne.s32.totalorder %s45, %s46
    %p58 = scmp.eq.s32.totalorder %s15, 1
    %p59 = por %p57, %p58
    %p61 = scmp.ne.s32.totalorder %s46, %s60
    %p62 = scmp.eq.s32.totalorder %s15, 0
    %p63 = por %p61, %p62
    %s65 = sadd.s32 %s64, 1
    %p68 = scmp.eq.s32.totalorder %s9, 1
    %p69 = scmp.ne.s32.totalorder %s64, %s66
    %p70 = scmp.eq.s32.totalorder %s9, 0
    %p71 = por %p69, %p70
    %p72 = scmp.ne.s32.totalorder %s64, %s66
    %p73 = scmp.eq.s32.totalorder %s14, 1
    %p74 = por %p72, %p73
    %p75 = scmp.ne.s32.totalorder %s66, %s67
    %p76 = scmp.eq.s32.totalorder %s14, 0
    %p77 = por %p75, %p76
    %p78 = scmp.ne.s32.totalorder %s66, %s67
    %p79 = scmp.eq.s32.totalorder %s15, 1
    %p80 = por %p78, %p79
    %p82 = scmp.ne.s32.totalorder %s67, %s81
    %p83 = scmp.eq.s32.totalorder %s15, 0
    %p84 = por %p82, %p83
    %s85 = ssub.s32 %s9, %s16
    %p86 = scmp.eq.s32.totalorder %s85, 0
    %s88 = sadd.s32 %s87, 1
    %s89 = scalar_select %p86, %s87, %s88
    %p92 = pneg %p86
    %p93 = scmp.eq.s32.totalorder %s9, 1
    %p94 = por %p92, %p93
    %p95 = scmp.ne.s32.totalorder %s87, %s90
    %p96 = scmp.eq.s32.totalorder %s9, 0
    %p97 = por %p95, %p96
    %p98 = scmp.ne.s32.totalorder %s87, %s90
    %p99 = scmp.eq.s32.totalorder %s14, 1
    %p100 = por %p98, %p99
    %p101 = scmp.ne.s32.totalorder %s90, %s91
    %p102 = scmp.eq.s32.totalorder %s14, 0
    %p103 = por %p101, %p102
    %p104 = scmp.ne.s32.totalorder %s90, %s91
    %p105 = scmp.eq.s32.totalorder %s15, 1
    %p106 = por %p104, %p105
    %p108 = scmp.ne.s32.totalorder %s91, %s107
    %p109 = scmp.eq.s32.totalorder %s15, 0
    %p110 = por %p108, %p109
    %p111 = scmp.le.s32.totalorder 1, %s9
    %p112 = scmp.lt.s32.totalorder %s9, 3
    %p113 = pnand %p111, %p112
    %p114 = pneg %p113
    // Predicated region
    $region9: #{tpu_custom_call.1} parent=5 // pred_check
      _
    $region10: #{tpu_custom_call.1} parent=5 // pred_check_branch
      %116 = sbr.rel (%p113) target = $region12
    $region11: #{tpu_custom_call.1} parent=5 // pred_region
      %s117 = ssub.s32 %s9, 1
      // Predicated region
      $region13: #{tpu_custom_call.1} parent=11 // pred_check
        %p118 = pneg %p56
      $region14: #{tpu_custom_call.1} parent=11 // pred_check_branch
        %120 = sbr.rel (%p118) target = $region16
      $region15: #{tpu_custom_call.1} parent=11 // pred_region
        _
      $region16: #{tpu_custom_call.1} parent=11 // pred_fallthru
        _
      // Predicated region
      $region17: #{tpu_custom_call.1} parent=11 // pred_check
        %p121 = pneg %p77
      $region18: #{tpu_custom_call.1} parent=11 // pred_check_branch
        %123 = sbr.rel (%p121) target = $region20
      $region19: #{tpu_custom_call.1} parent=11 // pred_region
        _
      $region20: #{tpu_custom_call.1} parent=11 // pred_fallthru
        _
    $region12: #{tpu_custom_call.1} parent=5 // pred_fallthru
      _
    %p124 = scmp.lt.s32.totalorder %s9, 2
    // Predicated region
    $region21: #{tpu_custom_call.1} parent=5 // pred_check
      %p125 = pneg %p124
    $region22: #{tpu_custom_call.1} parent=5 // pred_check_branch
      %127 = sbr.rel (%p125) target = $region24
    $region23: #{tpu_custom_call.1} parent=5 // pred_region
      // Predicated region
      $region25: #{tpu_custom_call.1} parent=23 // pred_check
        %p128 = pneg %p29
      $region26: #{tpu_custom_call.1} parent=23 // pred_check_branch
        %130 = sbr.rel (%p128) target = $region28
      $region27: #{tpu_custom_call.1} parent=23 // pred_region
        %p131 = scmp.lt.s32.totalorder %s9, 1
        %s132 = scalar_select %p131, %s9, 1
        %s133 = smul.addr %s132, 8
        %s134 = smul.addr %s133, 8
        %s135 = scalar_lea.vmem %s0, %s134
      $region28: #{tpu_custom_call.1} parent=23 // pred_fallthru
        _
    $region24: #{tpu_custom_call.1} parent=5 // pred_fallthru
      _
    %p136 = scmp.le.s32.totalorder 1, %s9
    %p137 = scmp.lt.s32.totalorder %s9, 3
    %p138 = pnand %p136, %p137
    %p139 = pneg %p138
    // Predicated region
    $region29: #{tpu_custom_call.1} parent=5 // pred_check
      _
    $region30: #{tpu_custom_call.1} parent=5 // pred_check_branch
      %141 = sbr.rel (%p138) target = $region32
    $region31: #{tpu_custom_call.1} parent=5 // pred_region
      %s142 = ssub.s32 %s9, 1
      %p143 = scmp.lt.s32.totalorder %s14, 1
      %s144 = scalar_select %p143, %s14, 1
      %s145 = smul.addr %s144, 8
      %s146 = smul.addr %s145, 8
      %s147 = scalar_lea.vmem %s0, %s146
      %p148 = pneg %p35
      %p149 = pneg %p32
      %p150 = pneg %p56
      %p151 = pneg %p53
      %p152 = pneg %p77
      %p153 = pneg %p74
      %p154 = pneg %p103
      %p155 = pneg %p100
      %p156 = scmp.lt.s32.totalorder %s14, 1
      %s157 = scalar_select %p156, %s14, 1
      %s158 = smul.addr %s157, 8
      %s159 = smul.addr %s158, 8
      %s160 = scalar_lea.vmem %s3, %s159
      %p161 = scmp.lt.s32.totalorder %s14, 1
      %s162 = scalar_select %p161, %s14, 1
      %s163 = smul.addr %s162, 8
      %s164 = smul.addr %s163, 8
      %s165 = scalar_lea.vmem %s0, %s164
      %p166 = scmp.lt.s32.totalorder %s14, 1
      %s167 = scalar_select %p166, %s14, 1
      %s168 = smul.addr %s167, 8
      %s169 = smul.addr %s168, 8
      %s170 = scalar_lea.vmem %s3, %s169
      %v171 = vld [vmem:[%s1] sm:$0x1]
      %v172 = vld [vmem:[%s2] sm:$0x1]
      %v173 = vld [vmem:[%s165] sm:$0xff]
      %v174 = vld [vmem:[%s165 + $0x8] sm:$0xff]
      %v175 = vld [vmem:[%s165 + $0x10] sm:$0xff]
      %v176 = vld [vmem:[%s165 + $0x18] sm:$0xff]
      %v177 = vld [vmem:[%s165 + $0x20] sm:$0xff]
      %v178 = vld [vmem:[%s165 + $0x28] sm:$0xff]
      %v179 = vld [vmem:[%s165 + $0x30] sm:$0xff]
      %v180 = vld [vmem:[%s165 + $0x38] sm:$0xff]
      %v181 = vmul.f32 %v173, %v173
      %v182 = vmul.f32 %v174, %v174
      %v183 = vmul.f32 %v175, %v175
      %v184 = vmul.f32 %v176, %v176
      %v185 = vmul.f32 %v177, %v177
      %v186 = vmul.f32 %v178, %v178
      %v187 = vmul.f32 %v179, %v179
      %v188 = vmul.f32 %v180, %v180
      %vm189 = vcmask 261120
      %v190 = vsel %vm189, %v181, 0.0
      %v191 = vsel %vm189, %v182, 0.0
      %v192 = vadd.f32 %v190, %v191
      %v193 = vsel %vm189, %v183, 0.0
      %v194 = vadd.f32 %v192, %v193
      %v195 = vsel %vm189, %v184, 0.0
      %v196 = vadd.f32 %v194, %v195
      %v197 = vsel %vm189, %v185, 0.0
      %v198 = vadd.f32 %v196, %v197
      %v199 = vsel %vm189, %v186, 0.0
      %v200 = vadd.f32 %v198, %v199
      %v201 = vsel %vm189, %v187, 0.0
      %v202 = vadd.f32 %v200, %v201
      %v203 = vsel %vm189, %v188, 0.0
      %v204 = vadd.f32 %v202, %v203
      %v205 = vrot.slane %v204, 4
      %v206 = vadd.f32 %v204, %v205
      %v207 = vrot.slane %v206, 2
      %v208 = vadd.f32 %v206, %v207
      %v209 = vrot.slane %v208, 1
      %v210 = vadd.f32 %v208, %v209
      %v211 = vadd.f32 %v210, 0.0
      %v212 = vrsqrt.pop %v211
      %v213 = vmul.f32 %v211, %v212
      %vm214 = vcmp.eq.f32.partialorder %v211, inf
      %v215 = vsel %vm214, %v211, %v213
      %vm216 = vcmp.eq.f32.partialorder %v211, 0.0
      %v217 = vand.u32 %v211, 2147483648
      %v218 = vsel %vm216, %v217, %v215
      %v219 = vsel %vm189, %v218, 0.0
      %220 = vadd.xlane.f32.xlu0 %v219
      %v221 = vpop.xlane.xlu0 %220
      %v222 = vrcp.pop 32.0
      %v223 = vmul.f32 %v221, %v222
      %v224 = vadd.f32 %v223, 1e-06
      %v225 = vrcp.pop %v224
      %v226 = vmul.f32 %v218, %v225
      %v227 = vmul.f32 %v171, %v226
      %v228 = vadd.f32 %v227, 1.0
      %v230 = vlaneseq
      %v231 = vshrl.u32 %v230, 7
      %v232 = vsub.s32 0, %v231
      %v233 = vrot.slane %v228, %v232
      %v236 = vlaneseq
      %v237 = vshrl.u32 %v236, 7
      %v238 = vsub.s32 0, %v237
      %v239 = vrot.slane %v172, %v238
      %v241 = vmul.f32 %v173, %v233
      %v242 = vmul.f32 %v174, %v233
      %v243 = vmul.f32 %v175, %v233
      %v244 = vmul.f32 %v176, %v233
      %v245 = vmul.f32 %v177, %v233
      %v246 = vmul.f32 %v178, %v233
      %v247 = vmul.f32 %v179, %v233
      %v248 = vmul.f32 %v180, %v233
      %v249 = vadd.f32 %v241, %v239
      %v250 = vadd.f32 %v242, %v239
      %v251 = vadd.f32 %v243, %v239
      %v252 = vadd.f32 %v244, %v239
      %v253 = vadd.f32 %v245, %v239
      %v254 = vadd.f32 %v246, %v239
      %v255 = vadd.f32 %v247, %v239
      %v256 = vadd.f32 %v248, %v239
      %257 = vst.msk [vmem:[%s170] sm:$0xff] %vm189, %v249
      %258 = vst.msk [vmem:[%s170 + $0x8] sm:$0xff] %vm189, %v250
      %259 = vst.msk [vmem:[%s170 + $0x10] sm:$0xff] %vm189, %v251
      %260 = vst.msk [vmem:[%s170 + $0x18] sm:$0xff] %vm189, %v252
      %261 = vst.msk [vmem:[%s170 + $0x20] sm:$0xff] %vm189, %v253
      %262 = vst.msk [vmem:[%s170 + $0x28] sm:$0xff] %vm189, %v254
      %263 = vst.msk [vmem:[%s170 + $0x30] sm:$0xff] %vm189, %v255
      %264 = vst.msk [vmem:[%s170 + $0x38] sm:$0xff] %vm189, %v256
      %p265 = scmp.lt.s32.totalorder %s14, 1
      %s266 = scalar_select %p265, %s14, 1
      %s267 = smul.addr %s266, 8
      %s268 = smul.addr %s267, 8
      %s269 = scalar_lea.vmem %s3, %s268
      // Predicated region
      $region33: #{tpu_custom_call.1} parent=31 // pred_check
        %p270 = pneg %p100
      $region34: #{tpu_custom_call.1} parent=31 // pred_check_branch
        %272 = sbr.rel (%p270) target = $region36
      $region35: #{tpu_custom_call.1} parent=31 // pred_region
        _
      $region36: #{tpu_custom_call.1} parent=31 // pred_fallthru
        _
    $region32: #{tpu_custom_call.1} parent=5 // pred_fallthru
      _
    %p273 = scmp.le.s32.totalorder 2, %s9
    // Predicated region
    $region37: #{tpu_custom_call.1} parent=5 // pred_check
      %p274 = pneg %p273
    $region38: #{tpu_custom_call.1} parent=5 // pred_check_branch
      %276 = sbr.rel (%p274) target = $region40
    $region39: #{tpu_custom_call.1} parent=5 // pred_region
      %s277 = ssub.s32 %s9, 2
      // Predicated region
      $region41: #{tpu_custom_call.1} parent=39 // pred_check
        %p278 = pneg %p106
      $region42: #{tpu_custom_call.1} parent=39 // pred_check_branch
        %280 = sbr.rel (%p278) target = $region44
      $region43: #{tpu_custom_call.1} parent=39 // pred_region
        %p281 = scmp.lt.s32.totalorder %s15, 1
        %s282 = scalar_select %p281, %s15, 1
        %s283 = smul.addr %s282, 8
        %s284 = smul.addr %s283, 8
        %s285 = scalar_lea.vmem %s3, %s284
      $region44: #{tpu_custom_call.1} parent=39 // pred_fallthru
        _
    $region40: #{tpu_custom_call.1} parent=5 // pred_fallthru
      _
  $region6: #{tpu_custom_call.1} parent=0 // loop_footer
    %s13 = sadd.s32 1, %s9
  $region7: #{tpu_custom_call.1} parent=0 // loop_footer_branch
    %8 = sbr.rel target = $region3
  $region8: #{tpu_custom_call.1} parent=0 // loop_exit
    _

</llo_original>
